<compile_context>
chip_gen: v7x
topology: tpu7x:2x2x1
jax: 0.10.0
libtpu: 0.0.40
codegen_flags: <defaults>
</compile_context>

<pallas_src>
import jax
import jax.numpy as jnp
from jax.experimental import pallas as pl
from jax.experimental.pallas import tpu as pltpu

SIZE = 8  # hidden size from the module (self.size = 8)


def _generator_kernel(x_ref, w1_ref, b1_ref, w2_ref, b2_ref, w3_ref, b3_ref, o_ref):
    # x_ref: (1, BN)  lane-major batch tile
    x = x_ref[...]                                   # (1, BN) f32

    # fc1: Linear(1 -> 8) as an outer product + bias (pure VPU broadcast FMA).
    #   h1[f, n] = w1[f, 0] * x[0, n] + b1[f, 0]
    h1 = jnp.maximum(w1_ref[...] * x + b1_ref[...], 0.0)          # (8, BN)

    # fc2: Linear(8 -> 8) as 8 broadcast-FMAs over the (8, BN) activation tile.
    #   h2[o, n] = sum_i w2[o, i] * h1[i, n] + b2[o, 0]
    w2 = w2_ref[...]                                 # (8, 8), (out, in)
    h2 = b2_ref[...] + w2[:, 0:1] * h1[0:1, :]       # (8, BN)
    for i in range(1, SIZE):                         # static unroll, VPU FMAs
        h2 = h2 + w2[:, i : i + 1] * h1[i : i + 1, :]
    h2 = jnp.maximum(h2, 0.0)

    # fc3: Linear(8 -> 1) as an 8-wide sublane reduction + bias.
    #   out[0, n] = sum_f w3[f, 0] * h2[f, n] + b3[0, 0]
    out = jnp.sum(w3_ref[...] * h2, axis=0, keepdims=True) + b3_ref[...]  # (1, BN)
    o_ref[...] = out.astype(o_ref.dtype)


def _round_up(a, b):
    return ((a + b - 1) // b) * b


def generator_forward(x, params, *, block_n=2048):
    """x: (N, 1) float32 noise.  Returns (N, 1) float32, matching nn.Linear math.

    params (kernel layout):
      w1: (8, 1)  (= fc1.weight)         b1: (8, 1)
      w2: (8, 8)  (= fc2.weight, out,in) b2: (8, 1)
      w3: (8, 1)  (= fc3.weight.T)       b3: (1, 1)
    """
    n = x.shape[0]
    w1, b1, w2, b2, w3, b3 = (
        params["w1"], params["b1"], params["w2"],
        params["b2"], params["w3"], params["b3"],
    )

    # Lane-major layout: batch on lanes.  Pad batch to a multiple of the tile.
    bn = min(block_n, _round_up(n, 128))
    n_pad = _round_up(n, bn)
    x_lane = x.reshape(1, n).astype(jnp.float32)
    if n_pad != n:
        x_lane = jnp.pad(x_lane, ((0, 0), (0, n_pad - n)))

    grid = (n_pad // bn,)

    # Tiny weights/biases: full-array blocks with constant index_map -> resident.
    const2 = lambda a: pl.BlockSpec(a.shape, lambda i: (0, 0))

    out = pl.pallas_call(
        _generator_kernel,
        out_shape=jax.ShapeDtypeStruct((1, n_pad), jnp.float32),
        grid=grid,
        in_specs=[
            pl.BlockSpec((1, bn), lambda i: (0, i)),   # x tile (lane-dense)
            const2(w1), const2(b1),
            const2(w2), const2(b2),
            const2(w3), const2(b3),
        ],
        out_specs=pl.BlockSpec((1, bn), lambda i: (0, i)),
        compiler_params=pltpu.CompilerParams(
            dimension_semantics=("parallel",),         # 2-TC sharding on v7x
        ),
    )(x_lane, w1, b1, w2, b2, w3, b3)

    return out[0, :n].reshape(n, 1)


def init_params(key):
    """Deterministic init mimicking nn.Linear default (uniform +-1/sqrt(fan_in)),
    stored directly in the kernel's lane-major-friendly layout."""
    k1, k2, k3, k4, k5, k6 = jax.random.split(key, 6)

    def lin(kw, kb, fan_in, fan_out):
        bound = 1.0 / jnp.sqrt(float(fan_in))
        # weight as (out, in), bias as (out, 1) -- matches PyTorch, column biases
        w = jax.random.uniform(kw, (fan_out, fan_in), jnp.float32, -bound, bound)
        b = jax.random.uniform(kb, (fan_out, 1), jnp.float32, -bound, bound)
        return w, b

    w1, b1 = lin(k1, k2, 1, SIZE)       # fc1: Linear(1, 8)   -> w1 (8, 1)
    w2, b2 = lin(k3, k4, SIZE, SIZE)    # fc2: Linear(8, 8)   -> w2 (8, 8)
    w3, b3 = lin(k5, k6, SIZE, 1)       # fc3: Linear(8, 1)   -> w3 (1, 8)
    return {
        "w1": w1, "b1": b1,
        "w2": w2, "b2": b2,
        "w3": jnp.transpose(w3),        # (8, 1) for the sublane reduce
        "b3": b3.reshape(1, 1),
    }


def reference_forward(x, p):
    # Standard row-major nn.Linear math: y = x @ W.T + b
    h1 = jnp.maximum(x @ p["w1"].T + p["b1"].T, 0.0)   # (N, 8)
    h2 = jnp.maximum(h1 @ p["w2"].T + p["b2"].T, 0.0)  # (N, 8)
    return h2 @ p["w3"] + p["b3"]                      # (N, 1)


if __name__ == "__main__":
    key = jax.random.PRNGKey(0)
    k_params, k_x1, k_x2 = jax.random.split(key, 3)

    params = init_params(k_params)

    # Small batch matching the module's scalar-noise input (and a non-tile-
    # aligned tiny batch to exercise the padding path).
    x_small = jax.random.normal(k_x1, (8, 1), jnp.float32)
    x = jax.random.normal(k_x2, (256, 1), jnp.float32)

    out_small = jax.block_until_ready(generator_forward(x_small, params))
    out = jax.block_until_ready(generator_forward(x, params))

    ref_small = reference_forward(x_small, params)
    ref = reference_forward(x, params)

    assert out_small.shape == (8, 1)
    assert out.shape == (256, 1)
    assert jnp.allclose(out_small, ref_small, atol=1e-5, rtol=1e-5), (out_small, ref_small)
    assert jnp.allclose(out, ref, atol=1e-5, rtol=1e-5), (out, ref)

    print("KERNEL_OK")
</pallas_src>

<mosaic_0001>
module attributes {stable_mosaic.version = 11 : i64} {
  func.func @_generator_kernel(%arg0: i32, %arg1: memref<1x128xf32, #tpu.memory_space<vmem>>, %arg2: memref<8x1xf32, #tpu.memory_space<vmem>>, %arg3: memref<8x1xf32, #tpu.memory_space<vmem>>, %arg4: memref<8x8xf32, #tpu.memory_space<vmem>>, %arg5: memref<8x1xf32, #tpu.memory_space<vmem>>, %arg6: memref<8x1xf32, #tpu.memory_space<vmem>>, %arg7: memref<1x1xf32, #tpu.memory_space<vmem>>, %arg8: memref<1x128xf32, #tpu.memory_space<vmem>>) attributes {dimension_semantics = [#tpu.dimension_semantics<parallel>], iteration_bounds = array<i64: 1>, scalar_prefetch = 0 : i64, scratch_operands = 0 : i64, tpu.core_type = #tpu.core_type<tc>, window_params = [{transform_indices = @transform_0, window_bounds = array<i64: 1, 128>}, {pipeline_mode = #tpu.pipeline_mode<synchronous>, transform_indices = @transform_1, window_bounds = array<i64: 8, 1>}, {pipeline_mode = #tpu.pipeline_mode<synchronous>, transform_indices = @transform_2, window_bounds = array<i64: 8, 1>}, {pipeline_mode = #tpu.pipeline_mode<synchronous>, transform_indices = @transform_3, window_bounds = array<i64: 8, 8>}, {pipeline_mode = #tpu.pipeline_mode<synchronous>, transform_indices = @transform_4, window_bounds = array<i64: 8, 1>}, {pipeline_mode = #tpu.pipeline_mode<synchronous>, transform_indices = @transform_5, window_bounds = array<i64: 8, 1>}, {pipeline_mode = #tpu.pipeline_mode<synchronous>, transform_indices = @transform_6, window_bounds = array<i64: 1, 1>}, {transform_indices = @transform_7, window_bounds = array<i64: 1, 128>}]} {
    %c0 = arith.constant 0 : index
    %c0_0 = arith.constant 0 : index
    %0 = vector.load %arg1[%c0, %c0_0] : memref<1x128xf32, #tpu.memory_space<vmem>>, vector<1x128xf32>
    %c0_1 = arith.constant 0 : index
    %c0_2 = arith.constant 0 : index
    %1 = vector.load %arg2[%c0_1, %c0_2] : memref<8x1xf32, #tpu.memory_space<vmem>>, vector<8x1xf32>
    %2 = vector.broadcast %1 : vector<8x1xf32> to vector<8x128xf32>
    %3 = vector.broadcast %0 : vector<1x128xf32> to vector<8x128xf32>
    %4 = arith.mulf %2, %3 : vector<8x128xf32>
    %c0_3 = arith.constant 0 : index
    %c0_4 = arith.constant 0 : index
    %5 = vector.load %arg3[%c0_3, %c0_4] : memref<8x1xf32, #tpu.memory_space<vmem>>, vector<8x1xf32>
    %6 = vector.broadcast %5 : vector<8x1xf32> to vector<8x128xf32>
    %7 = arith.addf %4, %6 : vector<8x128xf32>
    %cst = arith.constant 0.000000e+00 : f32
    %8 = vector.broadcast %cst : f32 to vector<8x128xf32>
    %9 = arith.maximumf %7, %8 : vector<8x128xf32>
    %c0_5 = arith.constant 0 : index
    %c0_6 = arith.constant 0 : index
    %10 = vector.load %arg4[%c0_5, %c0_6] : memref<8x8xf32, #tpu.memory_space<vmem>>, vector<8x8xf32>
    %c0_7 = arith.constant 0 : index
    %c0_8 = arith.constant 0 : index
    %11 = vector.load %arg5[%c0_7, %c0_8] : memref<8x1xf32, #tpu.memory_space<vmem>>, vector<8x1xf32>
    %12 = vector.extract_strided_slice %10 {offsets = [0, 0], sizes = [8, 1], strides = [1, 1]} : vector<8x8xf32> to vector<8x1xf32>
    %13 = vector.extract_strided_slice %9 {offsets = [0, 0], sizes = [1, 128], strides = [1, 1]} : vector<8x128xf32> to vector<1x128xf32>
    %14 = vector.broadcast %12 : vector<8x1xf32> to vector<8x128xf32>
    %15 = vector.broadcast %13 : vector<1x128xf32> to vector<8x128xf32>
    %16 = arith.mulf %14, %15 : vector<8x128xf32>
    %17 = vector.broadcast %11 : vector<8x1xf32> to vector<8x128xf32>
    %18 = arith.addf %17, %16 : vector<8x128xf32>
    %19 = vector.extract_strided_slice %10 {offsets = [0, 1], sizes = [8, 1], strides = [1, 1]} : vector<8x8xf32> to vector<8x1xf32>
    %20 = vector.extract_strided_slice %9 {offsets = [1, 0], sizes = [1, 128], strides = [1, 1]} : vector<8x128xf32> to vector<1x128xf32>
    %21 = vector.broadcast %19 : vector<8x1xf32> to vector<8x128xf32>
    %22 = vector.broadcast %20 : vector<1x128xf32> to vector<8x128xf32>
    %23 = arith.mulf %21, %22 : vector<8x128xf32>
    %24 = arith.addf %18, %23 : vector<8x128xf32>
    %25 = vector.extract_strided_slice %10 {offsets = [0, 2], sizes = [8, 1], strides = [1, 1]} : vector<8x8xf32> to vector<8x1xf32>
    %26 = vector.extract_strided_slice %9 {offsets = [2, 0], sizes = [1, 128], strides = [1, 1]} : vector<8x128xf32> to vector<1x128xf32>
    %27 = vector.broadcast %25 : vector<8x1xf32> to vector<8x128xf32>
    %28 = vector.broadcast %26 : vector<1x128xf32> to vector<8x128xf32>
    %29 = arith.mulf %27, %28 : vector<8x128xf32>
    %30 = arith.addf %24, %29 : vector<8x128xf32>
    %31 = vector.extract_strided_slice %10 {offsets = [0, 3], sizes = [8, 1], strides = [1, 1]} : vector<8x8xf32> to vector<8x1xf32>
    %32 = vector.extract_strided_slice %9 {offsets = [3, 0], sizes = [1, 128], strides = [1, 1]} : vector<8x128xf32> to vector<1x128xf32>
    %33 = vector.broadcast %31 : vector<8x1xf32> to vector<8x128xf32>
    %34 = vector.broadcast %32 : vector<1x128xf32> to vector<8x128xf32>
    %35 = arith.mulf %33, %34 : vector<8x128xf32>
    %36 = arith.addf %30, %35 : vector<8x128xf32>
    %37 = vector.extract_strided_slice %10 {offsets = [0, 4], sizes = [8, 1], strides = [1, 1]} : vector<8x8xf32> to vector<8x1xf32>
    %38 = vector.extract_strided_slice %9 {offsets = [4, 0], sizes = [1, 128], strides = [1, 1]} : vector<8x128xf32> to vector<1x128xf32>
    %39 = vector.broadcast %37 : vector<8x1xf32> to vector<8x128xf32>
    %40 = vector.broadcast %38 : vector<1x128xf32> to vector<8x128xf32>
    %41 = arith.mulf %39, %40 : vector<8x128xf32>
    %42 = arith.addf %36, %41 : vector<8x128xf32>
    %43 = vector.extract_strided_slice %10 {offsets = [0, 5], sizes = [8, 1], strides = [1, 1]} : vector<8x8xf32> to vector<8x1xf32>
    %44 = vector.extract_strided_slice %9 {offsets = [5, 0], sizes = [1, 128], strides = [1, 1]} : vector<8x128xf32> to vector<1x128xf32>
    %45 = vector.broadcast %43 : vector<8x1xf32> to vector<8x128xf32>
    %46 = vector.broadcast %44 : vector<1x128xf32> to vector<8x128xf32>
    %47 = arith.mulf %45, %46 : vector<8x128xf32>
    %48 = arith.addf %42, %47 : vector<8x128xf32>
    %49 = vector.extract_strided_slice %10 {offsets = [0, 6], sizes = [8, 1], strides = [1, 1]} : vector<8x8xf32> to vector<8x1xf32>
    %50 = vector.extract_strided_slice %9 {offsets = [6, 0], sizes = [1, 128], strides = [1, 1]} : vector<8x128xf32> to vector<1x128xf32>
    %51 = vector.broadcast %49 : vector<8x1xf32> to vector<8x128xf32>
    %52 = vector.broadcast %50 : vector<1x128xf32> to vector<8x128xf32>
    %53 = arith.mulf %51, %52 : vector<8x128xf32>
    %54 = arith.addf %48, %53 : vector<8x128xf32>
    %55 = vector.extract_strided_slice %10 {offsets = [0, 7], sizes = [8, 1], strides = [1, 1]} : vector<8x8xf32> to vector<8x1xf32>
    %56 = vector.extract_strided_slice %9 {offsets = [7, 0], sizes = [1, 128], strides = [1, 1]} : vector<8x128xf32> to vector<1x128xf32>
    %57 = vector.broadcast %55 : vector<8x1xf32> to vector<8x128xf32>
    %58 = vector.broadcast %56 : vector<1x128xf32> to vector<8x128xf32>
    %59 = arith.mulf %57, %58 : vector<8x128xf32>
    %60 = arith.addf %54, %59 : vector<8x128xf32>
    %cst_9 = arith.constant 0.000000e+00 : f32
    %61 = vector.broadcast %cst_9 : f32 to vector<8x128xf32>
    %62 = arith.maximumf %60, %61 : vector<8x128xf32>
    %c0_10 = arith.constant 0 : index
    %c0_11 = arith.constant 0 : index
    %63 = vector.load %arg6[%c0_10, %c0_11] : memref<8x1xf32, #tpu.memory_space<vmem>>, vector<8x1xf32>
    %64 = vector.broadcast %63 : vector<8x1xf32> to vector<8x128xf32>
    %65 = arith.mulf %64, %62 : vector<8x128xf32>
    %cst_12 = arith.constant dense<0.000000e+00> : vector<128xf32>
    %66 = vector.multi_reduction <add>, %65, %cst_12 [0] : vector<8x128xf32> to vector<128xf32>
    %67 = vector.shape_cast %66 : vector<128xf32> to vector<1x128xf32>
    %c0_13 = arith.constant 0 : index
    %c0_14 = arith.constant 0 : index
    %68 = vector.load %arg7[%c0_13, %c0_14] : memref<1x1xf32, #tpu.memory_space<vmem>>, vector<1x1xf32>
    %69 = vector.broadcast %68 : vector<1x1xf32> to vector<1x128xf32>
    %70 = arith.addf %67, %69 : vector<1x128xf32>
    %c0_15 = arith.constant 0 : index
    %c0_16 = arith.constant 0 : index
    %71 = vector.load %arg8[%c0_15, %c0_16] : memref<1x128xf32, #tpu.memory_space<vmem>>, vector<1x128xf32>
    tpu.vector_store %arg8[%c0_15, %c0_16], %70 {strides = array<i32>} : memref<1x128xf32, #tpu.memory_space<vmem>>, vector<1x128xf32>,
    return
  }
  func.func @transform_0(%arg0: i32) -> (i32, i32) {
    %c0_i32 = arith.constant 0 : i32
    %c0_i32_0 = arith.constant 0 : i32
    return %c0_i32, %arg0 : i32, i32
  }
  func.func @transform_1(%arg0: i32) -> (i32, i32) {
    %c0_i32 = arith.constant 0 : i32
    %c0_i32_0 = arith.constant 0 : i32
    %c0_i32_1 = arith.constant 0 : i32
    return %c0_i32, %c0_i32_0 : i32, i32
  }
  func.func @transform_2(%arg0: i32) -> (i32, i32) {
    %c0_i32 = arith.constant 0 : i32
    %c0_i32_0 = arith.constant 0 : i32
    %c0_i32_1 = arith.constant 0 : i32
    return %c0_i32, %c0_i32_0 : i32, i32
  }
  func.func @transform_3(%arg0: i32) -> (i32, i32) {
    %c0_i32 = arith.constant 0 : i32
    %c0_i32_0 = arith.constant 0 : i32
    %c0_i32_1 = arith.constant 0 : i32
    return %c0_i32, %c0_i32_0 : i32, i32
  }
  func.func @transform_4(%arg0: i32) -> (i32, i32) {
    %c0_i32 = arith.constant 0 : i32
    %c0_i32_0 = arith.constant 0 : i32
    %c0_i32_1 = arith.constant 0 : i32
    return %c0_i32, %c0_i32_0 : i32, i32
  }
  func.func @transform_5(%arg0: i32) -> (i32, i32) {
    %c0_i32 = arith.constant 0 : i32
    %c0_i32_0 = arith.constant 0 : i32
    %c0_i32_1 = arith.constant 0 : i32
    return %c0_i32, %c0_i32_0 : i32, i32
  }
  func.func @transform_6(%arg0: i32) -> (i32, i32) {
    %c0_i32 = arith.constant 0 : i32
    %c0_i32_0 = arith.constant 0 : i32
    %c0_i32_1 = arith.constant 0 : i32
    return %c0_i32, %c0_i32_0 : i32, i32
  }
  func.func @transform_7(%arg0: i32) -> (i32, i32) {
    %c0_i32 = arith.constant 0 : i32
    %c0_i32_0 = arith.constant 0 : i32
    return %c0_i32, %arg0 : i32, i32
  }
}

</mosaic_0001>

<llo_original>
// kernel: tpu_custom_call.1
$region0: #{tpu_custom_call.1}
  #allocation0 [shape = 'u32[]', space=smem, size = 0x4, offset = 0x4, fixed_abs, tag = 'smem constant byte address 0x4 - core index']
  #allocation1 [shape = 'u32[144,128]{1,0:T(1,128)}', space=vmem, size = 0x12000, scoped, tag = 'internal scratch']
  #allocation2 [shape = 'f32[1,1]{1,0:T(1,128)S(1)}', space=vmem, size = 0x200, scoped, tag = 'scoped memory for tpu_custom_call.1']
  %s0 = inlined_call_operand.vmem [shape: f32[1,128], index: 0, kind: input, shape index: {}]
  %s1 = inlined_call_operand.vmem [shape: f32[8,1], index: 1, kind: input, shape index: {}]
  %s2 = inlined_call_operand.vmem [shape: f32[8,1], index: 2, kind: input, shape index: {}]
  %s3 = inlined_call_operand.vmem [shape: f32[8,8], index: 3, kind: input, shape index: {}]
  %s4 = inlined_call_operand.vmem [shape: f32[8,1], index: 4, kind: input, shape index: {}]
  %s5 = inlined_call_operand.vmem [shape: f32[8,1], index: 5, kind: input, shape index: {}]
  %s6 = inlined_call_operand.<no memory space> [shape: f32[1,1], index: 6, kind: input, shape index: {}]
  %s7 = inlined_call_operand.hbm [shape: f32[1,128], index: 7, kind: output, shape index: {}]
  %s8 = sld [smem:[#allocation0]]
  $region38: #{tpu_custom_call.1} parent=0
    _
  %s10 = ssub.s32 1, %s8
  %s11 = scalar_select 0, %s10, %s8
  %v12 = vstv %s6
  %13 = vst [vmem:[#allocation2] sm:$0x1] %v12
  $region1: #{tpu_custom_call.1} parent=0
    #allocation3 [shape = 'u8[512]{0}', space=vmem, size = 0x400, scoped, tag = 'output window, operand 0, single buffered']
    #allocation4 [shape = 's32[1]{0}', space=sflag, size = 0x4, scoped, tag = 'scoped memory for tpu_custom_call.1']
    %14 = vsyncpa [#allocation4], 0
    // Predicated region
    $region2: #{tpu_custom_call.1} parent=1 // pred_check
      _
    $region3: #{tpu_custom_call.1} parent=1 // pred_check_branch
      %16 = sbr.rel (0) target = $region5
    $region4: #{tpu_custom_call.1} parent=1 // pred_region
      _
    $region5: #{tpu_custom_call.1} parent=1 // pred_fallthru
      _
    // Predicated region
    $region6: #{tpu_custom_call.1} parent=1 // pred_check
      _
    $region7: #{tpu_custom_call.1} parent=1 // pred_check_branch
      %18 = sbr.rel (0) target = $region9
    $region8: #{tpu_custom_call.1} parent=1 // pred_region
      _
    $region9: #{tpu_custom_call.1} parent=1 // pred_fallthru
      _
    // Predicated region
    $region10: #{tpu_custom_call.1} parent=1 // pred_check
      _
    $region11: #{tpu_custom_call.1} parent=1 // pred_check_branch
      %20 = sbr.rel (0) target = $region13
    $region12: #{tpu_custom_call.1} parent=1 // pred_region
      _
    $region13: #{tpu_custom_call.1} parent=1 // pred_fallthru
      _
    // Predicated region
    $region14: #{tpu_custom_call.1} parent=1 // pred_check
      _
    $region15: #{tpu_custom_call.1} parent=1 // pred_check_branch
      %22 = sbr.rel (0) target = $region17
    $region16: #{tpu_custom_call.1} parent=1 // pred_region
      _
    $region17: #{tpu_custom_call.1} parent=1 // pred_fallthru
      _
    // Predicated region
    $region18: #{tpu_custom_call.1} parent=1 // pred_check
      _
    $region19: #{tpu_custom_call.1} parent=1 // pred_check_branch
      %24 = sbr.rel (0) target = $region21
    $region20: #{tpu_custom_call.1} parent=1 // pred_region
      _
    $region21: #{tpu_custom_call.1} parent=1 // pred_fallthru
      _
    // Predicated region
    $region22: #{tpu_custom_call.1} parent=1 // pred_check
      _
    $region23: #{tpu_custom_call.1} parent=1 // pred_check_branch
      %26 = sbr.rel (0) target = $region25
    $region24: #{tpu_custom_call.1} parent=1 // pred_region
      _
    $region25: #{tpu_custom_call.1} parent=1 // pred_fallthru
      _
    // Predicated region
    $region26: #{tpu_custom_call.1} parent=1 // pred_check
      _
    $region27: #{tpu_custom_call.1} parent=1 // pred_check_branch
      %28 = sbr.rel (0) target = $region29
    $region28: #{tpu_custom_call.1} parent=1 // pred_region
      _
    $region29: #{tpu_custom_call.1} parent=1 // pred_fallthru
      _
    %v29 = vld [vmem:[%s0] sm:$0x1]
    %v30 = vld [vmem:[%s1] sm:$0xff]
    %32 = vset.pattern.permute.xlu0 0
    %33 = vperm.xlu0 %32, %v30
    %v34 = vpop.permute.xlu0 %33
    %v37 = vlaneseq
    %v38 = vshrl.u32 %v37, 7
    %v39 = vsub.s32 0, %v38
    %v40 = vrot.slane %v29, %v39
    %v42 = vmul.f32 %v34, %v40
    %v43 = vld [vmem:[%s2] sm:$0xff]
    %45 = vset.pattern.permute.xlu0 0
    %46 = vperm.xlu0 %45, %v43
    %v47 = vpop.permute.xlu0 %46
    %v49 = vadd.f32 %v42, %v47
    %v50 = vmax.f32 %v49, 0.0
    %v51 = vld [vmem:[%s3] sm:$0xff]
    %v52 = vld [vmem:[%s4] sm:$0xff]
    %54 = vset.pattern.permute.xlu0 0
    %55 = vperm.xlu0 %54, %v51
    %v56 = vpop.permute.xlu0 %55
    %v58 = vlaneseq
    %v59 = vshrl.u32 %v58, 7
    %v60 = vsub.s32 0, %v59
    %v61 = vrot.slane %v50, %v60
    %v62 = vmul.f32 %v56, %v61
    %64 = vset.pattern.permute.xlu0 0
    %65 = vperm.xlu0 %64, %v52
    %v66 = vpop.permute.xlu0 %65
    %v68 = vadd.f32 %v66, %v62
    %69 = vset.pattern.permute.xlu0 1
    %70 = vperm.xlu0 %69, %v51
    %v71 = vpop.permute.xlu0 %70
    %v73 = vlaneseq
    %v74 = vshrl.u32 %v73, 7
    %v75 = vsub.s32 1, %v74
    %v76 = vrot.slane %v50, %v75
    %v77 = vmul.f32 %v71, %v76
    %v78 = vadd.f32 %v68, %v77
    %79 = vset.pattern.permute.xlu0 2
    %80 = vperm.xlu0 %79, %v51
    %v81 = vpop.permute.xlu0 %80
    %v83 = vlaneseq
    %v84 = vshrl.u32 %v83, 7
    %v85 = vsub.s32 2, %v84
    %v86 = vrot.slane %v50, %v85
    %v87 = vmul.f32 %v81, %v86
    %v88 = vadd.f32 %v78, %v87
    %89 = vset.pattern.permute.xlu0 3
    %90 = vperm.xlu0 %89, %v51
    %v91 = vpop.permute.xlu0 %90
    %v93 = vlaneseq
    %v94 = vshrl.u32 %v93, 7
    %v95 = vsub.s32 3, %v94
    %v96 = vrot.slane %v50, %v95
    %v97 = vmul.f32 %v91, %v96
    %v98 = vadd.f32 %v88, %v97
    %99 = vset.pattern.permute.xlu0 4
    %100 = vperm.xlu0 %99, %v51
    %v101 = vpop.permute.xlu0 %100
    %v103 = vlaneseq
    %v104 = vshrl.u32 %v103, 7
    %v105 = vsub.s32 4, %v104
    %v106 = vrot.slane %v50, %v105
    %v107 = vmul.f32 %v101, %v106
    %v108 = vadd.f32 %v98, %v107
    %109 = vset.pattern.permute.xlu0 5
    %110 = vperm.xlu0 %109, %v51
    %v111 = vpop.permute.xlu0 %110
    %v113 = vlaneseq
    %v114 = vshrl.u32 %v113, 7
    %v115 = vsub.s32 5, %v114
    %v116 = vrot.slane %v50, %v115
    %v117 = vmul.f32 %v111, %v116
    %v118 = vadd.f32 %v108, %v117
    %119 = vset.pattern.permute.xlu0 6
    %120 = vperm.xlu0 %119, %v51
    %v121 = vpop.permute.xlu0 %120
    %v123 = vlaneseq
    %v124 = vshrl.u32 %v123, 7
    %v125 = vsub.s32 6, %v124
    %v126 = vrot.slane %v50, %v125
    %v127 = vmul.f32 %v121, %v126
    %v128 = vadd.f32 %v118, %v127
    %129 = vset.pattern.permute.xlu0 7
    %130 = vperm.xlu0 %129, %v51
    %v131 = vpop.permute.xlu0 %130
    %v133 = vlaneseq
    %v134 = vshrl.u32 %v133, 7
    %v135 = vsub.s32 7, %v134
    %v136 = vrot.slane %v50, %v135
    %v137 = vmul.f32 %v131, %v136
    %v138 = vadd.f32 %v128, %v137
    %v139 = vmax.f32 %v138, 0.0
    %v140 = vld [vmem:[%s5] sm:$0xff]
    %142 = vset.pattern.permute.xlu0 0
    %143 = vperm.xlu0 %142, %v140
    %v144 = vpop.permute.xlu0 %143
    %v146 = vmul.f32 %v144, %v139
    %v147 = vrot.slane %v146, 4
    %v148 = vadd.f32 %v146, %v147
    %v149 = vrot.slane %v148, 2
    %v150 = vadd.f32 %v148, %v149
    %v151 = vrot.slane %v150, 1
    %v152 = vadd.f32 %v150, %v151
    %v153 = vld [vmem:[#allocation2] sm:$0x1]
    %155 = vset.pattern.permute.xlu0 0
    %156 = vperm.xlu0 %155, %v153
    %v157 = vpop.permute.xlu0 %156
    %v159 = vlaneseq
    %v160 = vshrl.u32 %v159, 7
    %v161 = vsub.s32 0, %v160
    %v162 = vrot.slane %v157, %v161
    %v163 = vadd.f32 %v152, %v162
    %164 = vst [vmem:[#allocation3] sm:$0x1] %v163
    // Predicated region
    $region30: #{tpu_custom_call.1} parent=1 // pred_check
      _
    $region31: #{tpu_custom_call.1} parent=1 // pred_check_branch
      %166 = sbr.rel (0) target = $region33
    $region32: #{tpu_custom_call.1} parent=1 // pred_region
      %s168 = ssub.s32 16, 16
      %169 = vsyncadd [#allocation4], %s168
      %s171 = sshll.u32 [#allocation3], 4
      %s172 = int_to_ptr.vmem [resolvable:$true] %s171
      %174 = dma.vmem_to_hbm [thread:$0]  %s172, 16, %s7, [#allocation4]
    $region33: #{tpu_custom_call.1} parent=1 // pred_fallthru
      _
    // Predicated region
    $region34: #{tpu_custom_call.1} parent=1 // pred_check
      _
    $region35: #{tpu_custom_call.1} parent=1 // pred_check_branch
      %176 = sbr.rel (0) target = $region37
    $region36: #{tpu_custom_call.1} parent=1 // pred_region
      %177 = dma.done [#allocation4], 16
    $region37: #{tpu_custom_call.1} parent=1 // pred_fallthru
      _
    %178 = vsyncpa [#allocation4], 1

</llo_original>
